<compile_context>
chip_gen: v7x
topology: tpu7x:2x2x1
jax: 0.10.0
libtpu: 0.0.40
codegen_flags: <defaults>
</compile_context>

<pallas_src>
import functools

import jax
import jax.numpy as jnp
from jax.experimental import pallas as pl
from jax.experimental.pallas import tpu as pltpu

_LANE = 128


def _cdiv(a, b):
    return (a + b - 1) // b


def _vmem_capacity_bytes():
    """Physical VMEM of the attached TPU; generation-aware fallback."""
    try:
        info = pltpu.get_tpu_info()
        cap = getattr(info, "vmem_capacity_bytes", None)
        if cap:
            return int(cap)
    except Exception:
        pass
    try:
        kind = jax.devices()[0].device_kind.lower()
        if "v7" in kind:
            return 64 * 1024 * 1024
    except Exception:
        pass
    # v5e / v6e have 128 MiB; do not under-budget them (review item 7).
    return 96 * 1024 * 1024


def _channel_conv_gate(y, w_ref, b_ref, pad_ref):
    """Conv1d(k=3, pad=1) over channels + sigmoid.

    y: (C, 1) f32 per-channel means.  pad_ref: (C+16, 1) f32 VMEM scratch used
    as a zero-padded staging buffer so the +/-1 channel shifts are plain
    static ref slices (no sublane concat / roll).
    """
    c = y.shape[0]
    zero = jnp.zeros((1, 1), dtype=jnp.float32)
    pad_ref[pl.ds(7, 1), :] = zero            # row 7        : left  zero pad
    pad_ref[pl.ds(c + 8, 1), :] = zero        # row C+8      : right zero pad
    pad_ref[pl.ds(8, c), :] = y               # rows 8..C+7  : y (aligned store)
    y_prev = pad_ref[pl.ds(7, c), :]          # y_prev[i] = y[i-1] (0 at i=0)
    y_next = pad_ref[pl.ds(9, c), :]          # y_next[i] = y[i+1] (0 at i=C-1)
    conv = w_ref[0] * y_prev + w_ref[1] * y + w_ref[2] * y_next + b_ref[0]
    return jax.nn.sigmoid(conv)


# ----------------------------------------------------------------------------
# Single-pass kernel: one batch element per grid step, full (C, HW) slab.
# ----------------------------------------------------------------------------
def _eca_single_pass_kernel(w_ref, b_ref, x_ref, o_ref, acc_ref, pad_ref, *,
                            hw, chunk):
    n_full = hw // chunk
    rem = hw - n_full * chunk

    # --- Global average pool: chunked f32 accumulation (no full-slab temp).
    acc_ref[...] = jnp.zeros_like(acc_ref)

    def _accum(start, size):
        xs = x_ref[:, pl.ds(start, size)]
        acc_ref[...] += jnp.sum(xs.astype(jnp.float32), axis=1, keepdims=True)

    if n_full > 0:
        def sum_body(i, carry):
            _accum(pl.multiple_of(i * chunk, chunk), chunk)
            return carry
        jax.lax.fori_loop(0, n_full, sum_body, 0)
    if rem > 0:
        _accum(n_full * chunk, rem)

    y = acc_ref[...] * (1.0 / hw)                       # (C, 1) f32
    gate = _channel_conv_gate(y, w_ref, b_ref, pad_ref)  # (C, 1) f32
    gate_x = gate.astype(o_ref.dtype)

    # --- Gating multiply: re-read the resident input block chunk-by-chunk so
    # no (C, HW) value is held live across the gate math.
    def _apply(start, size):
        xs = x_ref[:, pl.ds(start, size)]
        o_ref[:, pl.ds(start, size)] = xs * gate_x

    if n_full > 0:
        def mul_body(i, carry):
            _apply(pl.multiple_of(i * chunk, chunk), chunk)
            return carry
        jax.lax.fori_loop(0, n_full, mul_body, 0)
    if rem > 0:
        _apply(n_full * chunk, rem)


def _eca_single_pass(x_flat, conv_weight, conv_bias, chunk, budget):
    B, C, HW = x_flat.shape
    itemsize = x_flat.dtype.itemsize
    kernel = functools.partial(_eca_single_pass_kernel, hw=HW, chunk=chunk)
    return pl.pallas_call(
        kernel,
        out_shape=jax.ShapeDtypeStruct((B, C, HW), x_flat.dtype),
        grid=(B,),
        in_specs=[
            pl.BlockSpec(memory_space=pltpu.MemorySpace.SMEM),   # conv weight (3,)
            pl.BlockSpec(memory_space=pltpu.MemorySpace.SMEM),   # conv bias (1,)
            pl.BlockSpec((None, C, HW), lambda b: (b, 0, 0)),
        ],
        out_specs=pl.BlockSpec((None, C, HW), lambda b: (b, 0, 0)),
        scratch_shapes=[
            pltpu.VMEM((C, 1), jnp.float32),        # pooled-sum accumulator
            pltpu.VMEM((C + 16, 1), jnp.float32),   # conv zero-pad staging
        ],
        compiler_params=pltpu.CompilerParams(
            dimension_semantics=("parallel",),
            vmem_limit_bytes=int(budget),
        ),
        cost_estimate=pl.CostEstimate(
            flops=int(2 * B * C * HW),
            transcendentals=int(B * C),
            bytes_accessed=int(2 * B * C * HW * itemsize),
        ),
    )(conv_weight, conv_bias, x_flat)


# ----------------------------------------------------------------------------
# Two-pass fallback: pass 1 = pooled gate (reduction over HW tiles, masked
# tail tile), pass 2 = fully parallel apply-gate with VMEM-resident gate.
# ----------------------------------------------------------------------------
def _eca_gate_kernel(w_ref, b_ref, x_ref, g_ref, acc_ref, pad_ref, *, hw, thw):
    t = pl.program_id(1)

    @pl.when(t == 0)
    def _():
        acc_ref[...] = jnp.zeros_like(acc_ref)

    c = x_ref.shape[0]
    lane = jax.lax.broadcasted_iota(jnp.int32, (c, thw), 1)
    valid = (t * thw + lane) < hw           # mask the (unpadded) tail tile
    xs = jnp.where(valid, x_ref[...].astype(jnp.float32), 0.0)
    acc_ref[...] += jnp.sum(xs, axis=1, keepdims=True)

    @pl.when(t == pl.num_programs(1) - 1)
    def _():
        y = acc_ref[...] * (1.0 / hw)                       # (C, 1) f32
        g_ref[...] = _channel_conv_gate(y, w_ref, b_ref, pad_ref)


def _eca_apply_kernel(g_ref, x_ref, o_ref):
    bi = pl.program_id(0)
    g = g_ref[bi]                                           # (C, 1) f32, VMEM-resident
    o_ref[...] = x_ref[...] * g.astype(o_ref.dtype)


def _eca_two_pass(x_flat, conv_weight, conv_bias, thw, budget):
    B, C, HW = x_flat.shape
    nt = _cdiv(HW, thw)
    itemsize = x_flat.dtype.itemsize

    gate = pl.pallas_call(
        functools.partial(_eca_gate_kernel, hw=HW, thw=thw),
        out_shape=jax.ShapeDtypeStruct((B, C, 1), jnp.float32),
        grid=(B, nt),
        in_specs=[
            pl.BlockSpec(memory_space=pltpu.MemorySpace.SMEM),
            pl.BlockSpec(memory_space=pltpu.MemorySpace.SMEM),
            pl.BlockSpec((None, C, thw), lambda b, t: (b, 0, t)),
        ],
        out_specs=pl.BlockSpec((None, C, 1), lambda b, t: (b, 0, 0)),
        scratch_shapes=[
            pltpu.VMEM((C, 1), jnp.float32),
            pltpu.VMEM((C + 16, 1), jnp.float32),
        ],
        compiler_params=pltpu.CompilerParams(
            dimension_semantics=("parallel", "arbitrary"),   # HW axis MUST stay arbitrary
            vmem_limit_bytes=int(budget),
        ),
        cost_estimate=pl.CostEstimate(
            flops=int(B * C * HW),
            transcendentals=int(B * C),
            bytes_accessed=int(B * C * HW * itemsize),
        ),
    )(conv_weight, conv_bias, x_flat)

    out = pl.pallas_call(
        _eca_apply_kernel,
        out_shape=jax.ShapeDtypeStruct((B, C, HW), x_flat.dtype),
        grid=(B, nt),
        in_specs=[
            pl.BlockSpec(memory_space=pltpu.MemorySpace.VMEM),  # (B, C, 1) gate, resident
            pl.BlockSpec((None, C, thw), lambda b, t: (b, 0, t)),
        ],
        out_specs=pl.BlockSpec((None, C, thw), lambda b, t: (b, 0, t)),
        compiler_params=pltpu.CompilerParams(
            dimension_semantics=("parallel", "parallel"),
            vmem_limit_bytes=int(budget),
        ),
        cost_estimate=pl.CostEstimate(
            flops=int(B * C * HW),
            transcendentals=0,
            bytes_accessed=int(2 * B * C * HW * itemsize),
        ),
    )(gate, x_flat)
    return out


def _pick_hw_tile(C, HW, itemsize, budget, hw_tile):
    if hw_tile is not None:
        thw = max(_LANE, (int(hw_tile) // _LANE) * _LANE)
    else:
        # Aim for ~2 MiB x-blocks (so small-C shapes still amortize per-step
        # overhead), capped so ~6 blocks fit the VMEM budget.
        target = (2 << 20) // max(C * itemsize, 1)
        cap = budget // max(6 * C * itemsize, 1)
        thw = min(target, cap, 8192)
        thw = max(_LANE, (thw // _LANE) * _LANE)
    if HW <= thw:
        thw = HW            # single full-width tile (block dim == array dim)
    return int(thw)


# ----------------------------------------------------------------------------
# Public wrapper.
# ----------------------------------------------------------------------------
def eca_attention(x, conv_weight, conv_bias, *, force_two_pass=False, hw_tile=None):
    """x: (B, C, H, W); conv_weight: (3,) (Conv1d(1,1,3) weight); conv_bias: (1,)."""
    B, C, H, W = x.shape
    HW = H * W
    x_flat = x.reshape(B, C, HW)            # minor-dim merge: free, no HBM pass
    itemsize = x_flat.dtype.itemsize

    conv_weight = conv_weight.reshape(3).astype(jnp.float32)
    conv_bias = conv_bias.reshape(1).astype(jnp.float32)

    budget = (_vmem_capacity_bytes() * 3) // 4

    # Lane-chunk for the in-kernel pooled reduction / gating multiply:
    # bounded so the transient f32 chunk is ~<=1 MiB, multiple of 128 lanes.
    chunk = max(_LANE, min(4096, ((1 << 20) // max(4 * C, 1)) // _LANE * _LANE))

    # Single-pass footprint: double-buffered in+out blocks, the chunked f32
    # temporary (no full-slab f32 copy any more), tiny scratches, slack.
    single_bytes = (4 * C * HW * itemsize
                    + 2 * C * min(chunk, HW) * 4
                    + (2 * C + 16) * 4
                    + (1 << 20))
    use_single = (not force_two_pass) and single_bytes <= budget

    if use_single:
        out_flat = _eca_single_pass(x_flat, conv_weight, conv_bias, chunk, budget)
    else:
        # TODO(synk): halo channel-split single pass (1 read + 1 write) would
        # beat this 2-read + 1-write fallback for huge C*HW on v7x.
        thw = _pick_hw_tile(C, HW, itemsize, budget, hw_tile)
        out_flat = _eca_two_pass(x_flat, conv_weight, conv_bias, thw, budget)

    return out_flat.reshape(B, C, H, W)


def eca_reference(x, conv_weight, conv_bias):
    """Pure-JAX reference mirroring the PyTorch forward."""
    B, C, H, W = x.shape
    y = jnp.mean(x.astype(jnp.float32), axis=(2, 3))                 # (B, C)
    yp = jnp.pad(y, ((0, 0), (1, 1)))                                # zero pad over C
    conv = (conv_weight[0] * yp[:, 0:C]
            + conv_weight[1] * yp[:, 1:C + 1]
            + conv_weight[2] * yp[:, 2:C + 2]
            + conv_bias[0])
    gate = jax.nn.sigmoid(conv)[:, :, None, None]
    return (x.astype(jnp.float32) * gate).astype(x.dtype)


if __name__ == "__main__":
    key = jax.random.PRNGKey(0)
    kx, kw, kb = jax.random.split(key, 3)

    B, C, H, W = 2, 4, 16, 16
    x = jax.random.normal(kx, (B, C, H, W), dtype=jnp.float32)

    # Conv1d(1, 1, kernel_size=3) params (weight (1, 1, 3) -> (3,)).
    conv_weight = jax.random.normal(kw, (3,), dtype=jnp.float32) * 0.5
    conv_bias = jax.random.normal(kb, (1,), dtype=jnp.float32) * 0.1

    ref = eca_reference(x, conv_weight, conv_bias)

    # 1) Default single-pass path (full (C, HW) slab per batch element).
    out = jax.block_until_ready(eca_attention(x, conv_weight, conv_bias))
    assert out.shape == x.shape
    assert jnp.allclose(out, ref, atol=1e-5, rtol=1e-5)

    # 2) Forced two-pass fallback at a small tile: exercises the HW-tiled
    #    reduction (+ VMEM-resident gate apply) kernels.
    out2 = jax.block_until_ready(
        eca_attention(x, conv_weight, conv_bias, force_two_pass=True, hw_tile=128))
    assert jnp.allclose(out2, ref, atol=1e-5, rtol=1e-5)

    # 3) Non-multiple-of-128 spatial size: no HBM padding in either path, and
    #    the two-pass path must mask its partial tail tile.
    x2 = jax.random.normal(kx, (B, C, 14, 14), dtype=jnp.float32)
    ref2 = eca_reference(x2, conv_weight, conv_bias)
    out3 = jax.block_until_ready(eca_attention(x2, conv_weight, conv_bias))
    assert jnp.allclose(out3, ref2, atol=1e-5, rtol=1e-5)
    out4 = jax.block_until_ready(
        eca_attention(x2, conv_weight, conv_bias, force_two_pass=True, hw_tile=128))
    assert jnp.allclose(out4, ref2, atol=1e-5, rtol=1e-5)

    # 4) bf16 input (gating multiply happens in bf16 -> bf16-appropriate tol).
    xb = x.astype(jnp.bfloat16)
    refb = eca_reference(xb, conv_weight, conv_bias).astype(jnp.float32)
    outb = jax.block_until_ready(eca_attention(xb, conv_weight, conv_bias))
    assert jnp.allclose(outb.astype(jnp.float32), refb, atol=1e-1, rtol=5e-2)

    print("KERNEL_OK")
</pallas_src>

<mosaic_0001>
module attributes {stable_mosaic.version = 11 : i64} {
  func.func @_eca_single_pass_kernel(%arg0: i32, %arg1: memref<3xf32, #tpu.memory_space<smem>>, %arg2: memref<1xf32, #tpu.memory_space<smem>>, %arg3: memref<1x4x256xf32, #tpu.memory_space<vmem>>, %arg4: memref<1x4x256xf32, #tpu.memory_space<vmem>>, %arg5: memref<4x1xf32, #tpu.memory_space<vmem>>, %arg6: memref<20x1xf32, #tpu.memory_space<vmem>>) attributes {dimension_semantics = [#tpu.dimension_semantics<parallel>], iteration_bounds = array<i64: 2>, scalar_prefetch = 0 : i64, scratch_operands = 2 : i64, tpu.core_type = #tpu.core_type<tc>, window_params = [{transform_indices = @transform_0, window_bounds = array<i64: 3>}, {transform_indices = @transform_1, window_bounds = array<i64: 1>}, {transform_indices = @transform_2, window_bounds = array<i64: 1, 4, 256>}, {transform_indices = @transform_3, window_bounds = array<i64: 1, 4, 256>}]} {
    %cst = arith.constant 0.000000e+00 : f32
    %0 = vector.broadcast %cst : f32 to vector<4x1xf32>
    %c0 = arith.constant 0 : index
    %c0_0 = arith.constant 0 : index
    %1 = vector.load %arg5[%c0, %c0_0] : memref<4x1xf32, #tpu.memory_space<vmem>>, vector<4x1xf32>
    tpu.vector_store %arg5[%c0, %c0_0], %0 {strides = array<i32>} : memref<4x1xf32, #tpu.memory_space<vmem>>, vector<4x1xf32>,
    %c0_1 = arith.constant 0 : index
    %c0_2 = arith.constant 0 : index
    %c0_3 = arith.constant 0 : index
    %2 = vector.load %arg3[%c0_1, %c0_2, %c0_3] : memref<1x4x256xf32, #tpu.memory_space<vmem>>, vector<1x4x256xf32>
    %3 = vector.shape_cast %2 : vector<1x4x256xf32> to vector<4x256xf32>
    %c0_4 = arith.constant 0 : index
    %c0_5 = arith.constant 0 : index
    %4 = vector.load %arg5[%c0_4, %c0_5] : memref<4x1xf32, #tpu.memory_space<vmem>>, vector<4x1xf32>
    %cst_6 = arith.constant dense<0.000000e+00> : vector<4xf32>
    %5 = vector.multi_reduction <add>, %3, %cst_6 [1] : vector<4x256xf32> to vector<4xf32>
    %6 = vector.shape_cast %5 : vector<4xf32> to vector<4x1xf32>
    %7 = arith.addf %4, %6 : vector<4x1xf32>
    %c0_7 = arith.constant 0 : index
    %c0_8 = arith.constant 0 : index
    %8 = vector.load %arg5[%c0_7, %c0_8] : memref<4x1xf32, #tpu.memory_space<vmem>>, vector<4x1xf32>
    tpu.vector_store %arg5[%c0_7, %c0_8], %7 {strides = array<i32>} : memref<4x1xf32, #tpu.memory_space<vmem>>, vector<4x1xf32>,
    %c0_9 = arith.constant 0 : index
    %c0_10 = arith.constant 0 : index
    %9 = vector.load %arg5[%c0_9, %c0_10] : memref<4x1xf32, #tpu.memory_space<vmem>>, vector<4x1xf32>
    %cst_11 = arith.constant 3.906250e-03 : f32
    %10 = vector.broadcast %cst_11 : f32 to vector<4x1xf32>
    %11 = arith.mulf %9, %10 : vector<4x1xf32>
    %cst_12 = arith.constant 0.000000e+00 : f32
    %12 = vector.broadcast %cst_12 : f32 to vector<1x1xf32>
    %c7 = arith.constant 7 : index
    %c0_13 = arith.constant 0 : index
    %13 = vector.load %arg6[%c7, %c0_13] : memref<20x1xf32, #tpu.memory_space<vmem>>, vector<1x1xf32>
    tpu.vector_store %arg6[%c7, %c0_13], %12 {strides = array<i32>} : memref<20x1xf32, #tpu.memory_space<vmem>>, vector<1x1xf32>,
    %c12 = arith.constant 12 : index
    %c0_14 = arith.constant 0 : index
    %14 = vector.load %arg6[%c12, %c0_14] : memref<20x1xf32, #tpu.memory_space<vmem>>, vector<1x1xf32>
    tpu.vector_store %arg6[%c12, %c0_14], %12 {strides = array<i32>} : memref<20x1xf32, #tpu.memory_space<vmem>>, vector<1x1xf32>,
    %c8 = arith.constant 8 : index
    %c0_15 = arith.constant 0 : index
    %15 = vector.load %arg6[%c8, %c0_15] : memref<20x1xf32, #tpu.memory_space<vmem>>, vector<4x1xf32>
    tpu.vector_store %arg6[%c8, %c0_15], %11 {strides = array<i32>} : memref<20x1xf32, #tpu.memory_space<vmem>>, vector<4x1xf32>,
    %c7_16 = arith.constant 7 : index
    %c0_17 = arith.constant 0 : index
    %16 = vector.load %arg6[%c7_16, %c0_17] : memref<20x1xf32, #tpu.memory_space<vmem>>, vector<4x1xf32>
    %c9 = arith.constant 9 : index
    %c0_18 = arith.constant 0 : index
    %17 = vector.load %arg6[%c9, %c0_18] : memref<20x1xf32, #tpu.memory_space<vmem>>, vector<4x1xf32>
    %c0_19 = arith.constant 0 : index
    %18 = memref.load %arg1[%c0_19] : memref<3xf32, #tpu.memory_space<smem>>
    %19 = vector.broadcast %18 : f32 to vector<4x1xf32>
    %20 = arith.mulf %19, %16 : vector<4x1xf32>
    %c1 = arith.constant 1 : index
    %21 = memref.load %arg1[%c1] : memref<3xf32, #tpu.memory_space<smem>>
    %22 = vector.broadcast %21 : f32 to vector<4x1xf32>
    %23 = arith.mulf %22, %11 : vector<4x1xf32>
    %24 = arith.addf %20, %23 : vector<4x1xf32>
    %c2 = arith.constant 2 : index
    %25 = memref.load %arg1[%c2] : memref<3xf32, #tpu.memory_space<smem>>
    %26 = vector.broadcast %25 : f32 to vector<4x1xf32>
    %27 = arith.mulf %26, %17 : vector<4x1xf32>
    %28 = arith.addf %24, %27 : vector<4x1xf32>
    %c0_20 = arith.constant 0 : index
    %29 = memref.load %arg2[%c0_20] : memref<1xf32, #tpu.memory_space<smem>>
    %30 = vector.broadcast %29 : f32 to vector<4x1xf32>
    %31 = arith.addf %28, %30 : vector<4x1xf32>
    %32 = arith.negf %31 : vector<4x1xf32>
    %33 = math.exp %32 : vector<4x1xf32>
    %cst_21 = arith.constant 1.000000e+00 : f32
    %34 = vector.broadcast %cst_21 : f32 to vector<4x1xf32>
    %35 = arith.addf %34, %33 : vector<4x1xf32>
    %36 = arith.divf %34, %35 : vector<4x1xf32>
    %c0_22 = arith.constant 0 : index
    %c0_23 = arith.constant 0 : index
    %c0_24 = arith.constant 0 : index
    %37 = vector.load %arg3[%c0_22, %c0_23, %c0_24] : memref<1x4x256xf32, #tpu.memory_space<vmem>>, vector<1x4x256xf32>
    %38 = vector.shape_cast %37 : vector<1x4x256xf32> to vector<4x256xf32>
    %39 = vector.broadcast %36 : vector<4x1xf32> to vector<4x256xf32>
    %40 = arith.mulf %38, %39 : vector<4x256xf32>
    %c0_25 = arith.constant 0 : index
    %c0_26 = arith.constant 0 : index
    %c0_27 = arith.constant 0 : index
    %41 = vector.load %arg4[%c0_25, %c0_26, %c0_27] : memref<1x4x256xf32, #tpu.memory_space<vmem>>, vector<1x4x256xf32>
    %42 = vector.shape_cast %41 : vector<1x4x256xf32> to vector<4x256xf32>
    %43 = vector.shape_cast %40 : vector<4x256xf32> to vector<1x4x256xf32>
    tpu.vector_store %arg4[%c0_25, %c0_26, %c0_27], %43 {strides = array<i32>} : memref<1x4x256xf32, #tpu.memory_space<vmem>>, vector<1x4x256xf32>,
    return
  }
  func.func @transform_0(%arg0: i32) -> i32 {
    %c0_i32 = arith.constant 0 : i32
    %c0_i32_0 = arith.constant 0 : i32
    return %c0_i32 : i32
  }
  func.func @transform_1(%arg0: i32) -> i32 {
    %c0_i32 = arith.constant 0 : i32
    %c0_i32_0 = arith.constant 0 : i32
    return %c0_i32 : i32
  }
  func.func @transform_2(%arg0: i32) -> (i32, i32, i32) {
    %c0_i32 = arith.constant 0 : i32
    %c0_i32_0 = arith.constant 0 : i32
    %c0_i32_1 = arith.constant 0 : i32
    return %arg0, %c0_i32, %c0_i32_0 : i32, i32, i32
  }
  func.func @transform_3(%arg0: i32) -> (i32, i32, i32) {
    %c0_i32 = arith.constant 0 : i32
    %c0_i32_0 = arith.constant 0 : i32
    %c0_i32_1 = arith.constant 0 : i32
    return %arg0, %c0_i32, %c0_i32_0 : i32, i32, i32
  }
}

</mosaic_0001>

<llo_original>
// kernel: tpu_custom_call.1
$region0: #{tpu_custom_call.1}
  #allocation0 [shape = 'u32[]', space=smem, size = 0x4, offset = 0x4, fixed_abs, tag = 'smem constant byte address 0x4 - core index']
  #allocation1 [shape = 'u32[144,128]{1,0:T(1,128)}', space=vmem, size = 0x12000, scoped, tag = 'internal scratch']
  #allocation2 [shape = 'f32[4,1]{1,0:T(4,128)}', space=vmem, size = 0x800, scoped, tag = 'scratch operand']
  #allocation3 [shape = 'f32[20,1]{1,0:T(8,128)}', space=vmem, size = 0x3000, scoped, tag = 'scratch operand']
  #allocation4 [shape = 'f32[1]{0:T(128)S(6)}', space=smem, size = 0x200, scoped, tag = 'scoped memory for tpu_custom_call.1']
  %s0 = inlined_call_operand.hbm [shape: f32[3], index: 0, kind: input, shape index: {}]
  %s1 = inlined_call_operand.<no memory space> [shape: f32[1], index: 1, kind: input, shape index: {}]
  %s2 = inlined_call_operand.hbm [shape: f32[2,4,256], index: 2, kind: input, shape index: {}]
  %s3 = inlined_call_operand.hbm [shape: f32[2,4,256], index: 3, kind: output, shape index: {}]
  %s4 = sld [smem:[#allocation0]]
  $region53: #{tpu_custom_call.1} parent=0
    _
  %s6 = ssub.s32 1, %s4
  %s7 = scalar_select 0, %s6, %s4
  %8 = sst [smem:[#allocation4]] %s1
  $region1: #{tpu_custom_call.1} parent=0
    #allocation5 [shape = 'u8[512]{0}', space=smem, size = 0x200, scoped, tag = 'input window, operand 0, single buffered']
    #allocation6 [shape = 's32[2]{0}', space=sflag, size = 0x8, scoped, tag = 'scoped memory for tpu_custom_call.1']
    #allocation7 [shape = 's32[2]{0}', space=sflag, size = 0x8, scoped, tag = 'scoped memory for tpu_custom_call.1']
    #allocation8 [shape = 's32[2]{0}', space=sflag, size = 0x8, scoped, tag = 'scoped memory for tpu_custom_call.1']
    #allocation9 [shape = 'u8[8192]{0}', space=vmem, size = 0x2000, scoped, tag = 'input window, operand 2']
    #allocation10 [shape = 'u8[8192]{0}', space=vmem, size = 0x2000, scoped, tag = 'output window, operand 0']
    %9 = vsyncpa [#allocation8], 0
    %10 = vsyncpa [#allocation6], 0
    %s11 = scalar_lea.sflag [#allocation6], 1
    %12 = vsyncpa %s11, 0
    %13 = vsyncpa [#allocation7], 0
    %s14 = scalar_lea.sflag [#allocation7], 1
    %15 = vsyncpa %s14, 0
    loop: start=0, step=1, limit=4
    $region2: #{tpu_custom_call.1} parent=1 // loop_pre_header
      _
    $region3: #{tpu_custom_call.1} parent=1 // loop_header
      %s17 = sphi 0, %s21
      %p18 = scmp.ge.s32.totalorder %s17, 4
      %s25 = sphi 0, %s25
      %s27 = sphi 0, %s25
      %s28 = sphi 0, %s27
      %s42 = sphi 0, %s28
      %s46 = sphi 0, %s46
      %s48 = sphi 0, %s46
      %s49 = sphi 0, %s48
      %s63 = sphi 0, %s49
      %s69 = sphi 0, %s71
      %s72 = sphi 0, %s69
      %s73 = sphi 0, %s72
      %s89 = sphi 0, %s73
      %s95 = sphi 0, %s97
      %s98 = sphi 0, %s95
      %s99 = sphi 0, %s98
      %s115 = sphi 0, %s99
    $region4: #{tpu_custom_call.1} parent=1 // loop_header_branch
      %20 = sbr.rel (%p18) target = $region8
    $region5: #{tpu_custom_call.1} parent=1 // loop_body
      %s22 = ssub.s32 %s17, 1
      %s23 = ssub.s32 %s17, 2
      %s24 = sadd.s32 %s17, 1
      %s26 = sadd.s32 %s25, 1
      %p29 = scmp.eq.s32.totalorder %s17, 1
      %p30 = scmp.ne.s32.totalorder %s25, %s27
      %p31 = scmp.eq.s32.totalorder %s17, 0
      %p32 = por %p30, %p31
      %p33 = scmp.ne.s32.totalorder %s25, %s27
      %p34 = scmp.eq.s32.totalorder %s22, 1
      %p35 = por %p33, %p34
      %p36 = scmp.ne.s32.totalorder %s27, %s28
      %p37 = scmp.eq.s32.totalorder %s22, 0
      %p38 = por %p36, %p37
      %p39 = scmp.ne.s32.totalorder %s27, %s28
      %p40 = scmp.eq.s32.totalorder %s23, 1
      %p41 = por %p39, %p40
      %p43 = scmp.ne.s32.totalorder %s28, %s42
      %p44 = scmp.eq.s32.totalorder %s23, 0
      %p45 = por %p43, %p44
      %s47 = sadd.s32 %s46, 1
      %p50 = scmp.eq.s32.totalorder %s17, 1
      %p51 = scmp.ne.s32.totalorder %s46, %s48
      %p52 = scmp.eq.s32.totalorder %s17, 0
      %p53 = por %p51, %p52
      %p54 = scmp.ne.s32.totalorder %s46, %s48
      %p55 = scmp.eq.s32.totalorder %s22, 1
      %p56 = por %p54, %p55
      %p57 = scmp.ne.s32.totalorder %s48, %s49
      %p58 = scmp.eq.s32.totalorder %s22, 0
      %p59 = por %p57, %p58
      %p60 = scmp.ne.s32.totalorder %s48, %s49
      %p61 = scmp.eq.s32.totalorder %s23, 1
      %p62 = por %p60, %p61
      %p64 = scmp.ne.s32.totalorder %s49, %s63
      %p65 = scmp.eq.s32.totalorder %s23, 0
      %p66 = por %p64, %p65
      %s67 = ssub.s32 %s17, %s24
      %p68 = scmp.eq.s32.totalorder %s67, 0
      %s70 = sadd.s32 %s69, 1
      %s71 = scalar_select %p68, %s69, %s70
      %p74 = pneg %p68
      %p75 = scmp.eq.s32.totalorder %s17, 1
      %p76 = por %p74, %p75
      %p77 = scmp.ne.s32.totalorder %s69, %s72
      %p78 = scmp.eq.s32.totalorder %s17, 0
      %p79 = por %p77, %p78
      %p80 = scmp.ne.s32.totalorder %s69, %s72
      %p81 = scmp.eq.s32.totalorder %s22, 1
      %p82 = por %p80, %p81
      %p83 = scmp.ne.s32.totalorder %s72, %s73
      %p84 = scmp.eq.s32.totalorder %s22, 0
      %p85 = por %p83, %p84
      %p86 = scmp.ne.s32.totalorder %s72, %s73
      %p87 = scmp.eq.s32.totalorder %s23, 1
      %p88 = por %p86, %p87
      %p90 = scmp.ne.s32.totalorder %s73, %s89
      %p91 = scmp.eq.s32.totalorder %s23, 0
      %p92 = por %p90, %p91
      %s93 = ssub.s32 %s17, %s24
      %p94 = scmp.eq.s32.totalorder %s93, 0
      %s96 = sadd.s32 %s95, 1
      %s97 = scalar_select %p94, %s95, %s96
      %p100 = pneg %p94
      %p101 = scmp.eq.s32.totalorder %s17, 1
      %p102 = por %p100, %p101
      %p103 = scmp.ne.s32.totalorder %s95, %s98
      %p104 = scmp.eq.s32.totalorder %s17, 0
      %p105 = por %p103, %p104
      %p106 = scmp.ne.s32.totalorder %s95, %s98
      %p107 = scmp.eq.s32.totalorder %s22, 1
      %p108 = por %p106, %p107
      %p109 = scmp.ne.s32.totalorder %s98, %s99
      %p110 = scmp.eq.s32.totalorder %s22, 0
      %p111 = por %p109, %p110
      %p112 = scmp.ne.s32.totalorder %s98, %s99
      %p113 = scmp.eq.s32.totalorder %s23, 1
      %p114 = por %p112, %p113
      %p116 = scmp.ne.s32.totalorder %s99, %s115
      %p117 = scmp.eq.s32.totalorder %s23, 0
      %p118 = por %p116, %p117
      %p119 = scmp.le.s32.totalorder 1, %s17
      %p120 = scmp.lt.s32.totalorder %s17, 3
      %p121 = pnand %p119, %p120
      %p122 = pneg %p121
      // Predicated region
      $region9: #{tpu_custom_call.1} parent=5 // pred_check
        _
      $region10: #{tpu_custom_call.1} parent=5 // pred_check_branch
        %124 = sbr.rel (%p121) target = $region12
      $region11: #{tpu_custom_call.1} parent=5 // pred_region
        %s125 = ssub.s32 %s17, 1
        // Predicated region
        $region13: #{tpu_custom_call.1} parent=11 // pred_check
          %p126 = pneg %p38
        $region14: #{tpu_custom_call.1} parent=11 // pred_check_branch
          %128 = sbr.rel (%p126) target = $region16
        $region15: #{tpu_custom_call.1} parent=11 // pred_region
          %s130 = ssub.s32 16, 16
          %131 = vsyncadd [#allocation8], %s130
          %134 = dma.hbm_to_smem %s0, 16, [#allocation5], [#allocation8]
        $region16: #{tpu_custom_call.1} parent=11 // pred_fallthru
          _
        // Predicated region
        $region17: #{tpu_custom_call.1} parent=11 // pred_check
          %p135 = pneg %p59
        $region18: #{tpu_custom_call.1} parent=11 // pred_check_branch
          %137 = sbr.rel (%p135) target = $region20
        $region19: #{tpu_custom_call.1} parent=11 // pred_region
          _
        $region20: #{tpu_custom_call.1} parent=11 // pred_fallthru
          _
      $region12: #{tpu_custom_call.1} parent=5 // pred_fallthru
        _
      %p138 = scmp.lt.s32.totalorder %s17, 2
      // Predicated region
      $region21: #{tpu_custom_call.1} parent=5 // pred_check
        %p139 = pneg %p138
      $region22: #{tpu_custom_call.1} parent=5 // pred_check_branch
        %141 = sbr.rel (%p139) target = $region24
      $region23: #{tpu_custom_call.1} parent=5 // pred_region
        // Predicated region
        $region25: #{tpu_custom_call.1} parent=23 // pred_check
          %p142 = pneg %p79
        $region26: #{tpu_custom_call.1} parent=23 // pred_check_branch
          %144 = sbr.rel (%p142) target = $region28
        $region27: #{tpu_custom_call.1} parent=23 // pred_region
          %s145 = sand.u32 %s69, 1
          %s146 = scalar_lea.sflag [#allocation6], %s145
          %s147 = sand.u32 %s69, 1
          %s148 = smul.addr %s147, 8
          %s149 = scalar_lea.vmem [#allocation9], %s148
          %s151 = ssub.s32 128, 128
          %152 = vsyncadd %s146, %s151
          %s153 = smul.addr %s17, 2
          %s154 = smul.addr %s153, 64
          %s155 = scalar_lea.hbm %s2, %s154
          %s157 = sshll.u32 %s149, 4
          %s158 = int_to_ptr.vmem [resolvable:$true] %s157
          %160 = dma.hbm_to_vmem [thread:$0]  %s155, 128, %s158, %s146
        $region28: #{tpu_custom_call.1} parent=23 // pred_fallthru
          _
      $region24: #{tpu_custom_call.1} parent=5 // pred_fallthru
        _
      %p161 = scmp.le.s32.totalorder 1, %s17
      %p162 = scmp.lt.s32.totalorder %s17, 3
      %p163 = pnand %p161, %p162
      %p164 = pneg %p163
      // Predicated region
      $region29: #{tpu_custom_call.1} parent=5 // pred_check
        _
      $region30: #{tpu_custom_call.1} parent=5 // pred_check_branch
        %166 = sbr.rel (%p163) target = $region32
      $region31: #{tpu_custom_call.1} parent=5 // pred_region
        %s167 = ssub.s32 %s17, 1
        // Predicated region
        $region33: #{tpu_custom_call.1} parent=31 // pred_check
          %p168 = pneg %p38
        $region34: #{tpu_custom_call.1} parent=31 // pred_check_branch
          %170 = sbr.rel (%p168) target = $region36
        $region35: #{tpu_custom_call.1} parent=31 // pred_region
          %171 = dma.done [#allocation8], 16
        $region36: #{tpu_custom_call.1} parent=31 // pred_fallthru
          _
        %s172 = sand.u32 %s72, 1
        %s173 = scalar_lea.sflag [#allocation6], %s172
        %s174 = sand.u32 %s72, 1
        %s175 = smul.addr %s174, 8
        %s176 = scalar_lea.vmem [#allocation9], %s175
        // Predicated region
        $region37: #{tpu_custom_call.1} parent=31 // pred_check
          %p177 = pneg %p85
        $region38: #{tpu_custom_call.1} parent=31 // pred_check_branch
          %179 = sbr.rel (%p177) target = $region40
        $region39: #{tpu_custom_call.1} parent=31 // pred_region
          %180 = dma.done %s173, 128
        $region40: #{tpu_custom_call.1} parent=31 // pred_fallthru
          _
        %181 = sfence
        %p182 = pneg %p38
        %p183 = pneg %p35
        %p184 = pneg %p59
        %p185 = pneg %p56
        %s186 = sand.u32 %s72, 1
        %s187 = scalar_lea.sflag [#allocation6], %s186
        %s188 = sand.u32 %s72, 1
        %s189 = smul.addr %s188, 8
        %s190 = scalar_lea.vmem [#allocation9], %s189
        %p191 = pneg %p85
        %p192 = pneg %p82
        %p193 = pneg %p111
        %p194 = pneg %p108
        %s195 = sand.u32 %s98, 1
        %s196 = scalar_lea.sflag [#allocation7], %s195
        %s197 = sand.u32 %s98, 1
        %s198 = smul.addr %s197, 8
        %s199 = scalar_lea.vmem [#allocation10], %s198
        %vm200 = vcmask 3072
        %201 = vst.msk [vmem:[#allocation2] sm:$0xf] %vm200, 0.0
        %v202 = vld [vmem:[%s176] sm:$0xff]
        %v203 = vld [vmem:[#allocation2] sm:$0xf]
        %v205 = vcombine.high %v202, %v202
        %vm207 = vcmask 1043456
        %v208 = vsel %vm207, %v202, 0.0
        %v209 = vsel %vm207, %v205, 0.0
        %v210 = vadd.f32 %v208, %v209
        %211 = vadd.xlane.f32.xlu0 %v210
        %v212 = vpop.xlane.xlu0 %211
        %v213 = vadd.f32 %v203, %v212
        %214 = vst.msk [vmem:[#allocation2] sm:$0xf] %vm200, %v213
        %v215 = vld [vmem:[#allocation2] sm:$0xf]
        %v216 = vmul.f32 %v215, 0.00390625
        %vm217 = vcmask 0
        %218 = vst.msk [vmem:[#allocation3 + $0x7] sm:$0x1] %vm217, 0.0
        %219 = vst.msk [vmem:[#allocation3 + $0xc] sm:$0x1] %vm217, 0.0
        %220 = vst.msk [vmem:[#allocation3 + $0x8] sm:$0xf] %vm200, %v216
        %v221 = vld [vmem:[#allocation3 + $0x7] sm:$0xf]
        %v222 = vld [vmem:[#allocation3 + $0x9] sm:$0xf]
        %s223 = sld [smem:[#allocation5]]
        %v224 = vstv %s223
        %v225 = vmul.f32 %v224, %v221
        %s226 = sld [smem:[#allocation5 + $0x1]]
        %v227 = vstv %s226
        %v228 = vmul.f32 %v227, %v216
        %v229 = vadd.f32 %v225, %v228
        %s230 = sld [smem:[#allocation5 + $0x2]]
        %v231 = vstv %s230
        %v232 = vmul.f32 %v231, %v222
        %v233 = vadd.f32 %v229, %v232
        %s234 = sld [smem:[#allocation4]]
        %v235 = vstv %s234
        %v236 = vadd.f32 %v233, %v235
        %v237 = vxor.u32 %v236, 2147483648
        %v238 = vmul.f32 %v237, 1.442695
        %v239 = vpow.pop %v238
        %v240 = vadd.f32 %v239, 1.0
        %v241 = vrcp.pop %v240
        %v242 = vmul.f32 1.0, %v241
        %v243 = vld [vmem:[%s176] sm:$0xff]
        %245 = vset.pattern.permute.xlu0 0
        %246 = vperm.xlu0 %245, %v242
        %v247 = vpop.permute.xlu0 %246
        %v249 = vunpack.c.l.s4 839922192
        %v250 = vunpack.c.0.s8 %v249
        %v251 = vlaneseq
        %v252 = vshrl.u32 %v251, 7
        %v253 = vsub.s32 %v250, %v252
        %v254 = vrot.slane %v247, %v253
        %v256 = vmul.f32 %v243, %v254
        %257 = vst [vmem:[%s199] sm:$0xff] %v256
        %s258 = sand.u32 %s98, 1
        %s259 = scalar_lea.sflag [#allocation7], %s258
        %s260 = sand.u32 %s98, 1
        %s261 = smul.addr %s260, 8
        %s262 = scalar_lea.vmem [#allocation10], %s261
        // Predicated region
        $region41: #{tpu_custom_call.1} parent=31 // pred_check
          %p263 = pneg %p108
        $region42: #{tpu_custom_call.1} parent=31 // pred_check_branch
          %265 = sbr.rel (%p263) target = $region44
        $region43: #{tpu_custom_call.1} parent=31 // pred_region
          %s267 = ssub.s32 128, 128
          %268 = vsyncadd %s259, %s267
          %s269 = smul.addr %s22, 2
          %s270 = smul.addr %s269, 64
          %s271 = scalar_lea.hbm %s3, %s270
          %s273 = sshll.u32 %s262, 4
          %s274 = int_to_ptr.vmem [resolvable:$true] %s273
          %276 = dma.vmem_to_hbm [thread:$0]  %s274, 128, %s271, %s259
        $region44: #{tpu_custom_call.1} parent=31 // pred_fallthru
          _
      $region32: #{tpu_custom_call.1} parent=5 // pred_fallthru
        _
      %p277 = scmp.le.s32.totalorder 2, %s17
      // Predicated region
      $region45: #{tpu_custom_call.1} parent=5 // pred_check
        %p278 = pneg %p277
      $region46: #{tpu_custom_call.1} parent=5 // pred_check_branch
        %280 = sbr.rel (%p278) target = $region48
      $region47: #{tpu_custom_call.1} parent=5 // pred_region
        %s281 = ssub.s32 %s17, 2
        // Predicated region
        $region49: #{tpu_custom_call.1} parent=47 // pred_check
          %p282 = pneg %p114
        $region50: #{tpu_custom_call.1} parent=47 // pred_check_branch
          %284 = sbr.rel (%p282) target = $region52
        $region51: #{tpu_custom_call.1} parent=47 // pred_region
          %s285 = sand.u32 %s99, 1
          %s286 = scalar_lea.sflag [#allocation7], %s285
          %s287 = sand.u32 %s99, 1
          %s288 = smul.addr %s287, 8
          %s289 = scalar_lea.vmem [#allocation10], %s288
          %290 = dma.done %s286, 128
        $region52: #{tpu_custom_call.1} parent=47 // pred_fallthru
          _
      $region48: #{tpu_custom_call.1} parent=5 // pred_fallthru
        _
    $region6: #{tpu_custom_call.1} parent=1 // loop_footer
      %s21 = sadd.s32 1, %s17
    $region7: #{tpu_custom_call.1} parent=1 // loop_footer_branch
      %16 = sbr.rel target = $region3
    $region8: #{tpu_custom_call.1} parent=1 // loop_exit
      _
    %291 = vsyncpa [#allocation6], 1
    %s292 = scalar_lea.sflag [#allocation6], 1
    %293 = vsyncpa %s292, 1
    %294 = vsyncpa [#allocation7], 1
    %s295 = scalar_lea.sflag [#allocation7], 1
    %296 = vsyncpa %s295, 1
    %297 = vsyncpa [#allocation8], 1
    %s298 = scalar_lea.sflag [#allocation8], 1
    %299 = vsyncpa %s298, 1

</llo_original>
